<compile_context>
chip_gen: v5e
topology: v5e:2x2
jax: 0.10.0
libtpu: 0.0.40
codegen_flags: <defaults>
</compile_context>

<pallas_src>
import functools

import jax
import jax.numpy as jnp
from jax import lax
from jax.experimental import pallas as pl
from jax.experimental.pallas import tpu as pltpu

_EDGE_TILE = 256


def _vmem_limit_bytes():
    # Generation-aware: ~75% of physical VMEM (64 MiB on v7x, 128 MiB v5e/v6e).
    cap = 64 * 1024 * 1024
    try:
        info = pltpu.get_tpu_info()
        c = getattr(info, "vmem_capacity_bytes", None)
        if c:
            cap = int(c)
    except Exception:
        pass
    return int(min(cap * 3 // 4, 100 * 1024 * 1024))


_VMEM_LIMIT = _vmem_limit_bytes()


# --------------------------------------------------------------------------
# Kernel 1: fused linear  y = relu?(x @ W' + s')   (W', s' pre-folded on host)
# --------------------------------------------------------------------------
def _linear_kernel(x_ref, w_ref, s_ref, o_ref, *, relu):
    y = jnp.dot(x_ref[...].astype(jnp.bfloat16), w_ref[...],
                preferred_element_type=jnp.float32) + s_ref[...]
    if relu:
        y = jnp.maximum(y, 0.0)
    o_ref[...] = y.astype(o_ref.dtype)


def fused_linear(x, w, b, *, relu=False, block_rows=1024):
    x = x.astype(jnp.float32)
    m, k = x.shape
    n = w.shape[1]
    wf = w.astype(jnp.bfloat16)
    sf = b.reshape(1, n).astype(jnp.float32)
    tm = m if m <= block_rows else block_rows
    grid = (pl.cdiv(m, tm),)
    return pl.pallas_call(
        functools.partial(_linear_kernel, relu=relu),
        out_shape=jax.ShapeDtypeStruct((m, n), jnp.float32),
        grid=grid,
        in_specs=[
            pl.BlockSpec((tm, k), lambda i: (i, 0)),
            pl.BlockSpec((k, n), lambda i: (0, 0)),
            pl.BlockSpec((1, n), lambda i: (0, 0)),
        ],
        out_specs=pl.BlockSpec((tm, n), lambda i: (i, 0)),
        compiler_params=pltpu.CompilerParams(
            dimension_semantics=("parallel",),
            vmem_limit_bytes=_VMEM_LIMIT,
        ),
    )(x, wf, sf)


# --------------------------------------------------------------------------
# Kernel 2: fused 2-layer MLP with folded BatchNorms
#   y = relu?( relu(x @ W1' + s1') @ W2' + s2' )
# (the (tm, 2*emb_dim) intermediate stays in VMEM/vregs, never hits HBM)
# --------------------------------------------------------------------------
def _mlp2_kernel(x_ref, w1_ref, s1_ref, w2_ref, s2_ref, o_ref, *, relu_out):
    u = jnp.dot(x_ref[...].astype(jnp.bfloat16), w1_ref[...],
                preferred_element_type=jnp.float32)
    u = jnp.maximum(u + s1_ref[...], 0.0)
    y = jnp.dot(u.astype(jnp.bfloat16), w2_ref[...],
                preferred_element_type=jnp.float32) + s2_ref[...]
    if relu_out:
        y = jnp.maximum(y, 0.0)
    o_ref[...] = y.astype(o_ref.dtype)


def fused_mlp2(x, w1, b1, scale1, shift1, w2, b2, scale2, shift2, *,
               relu_out, block_rows=1024):
    x = x.astype(jnp.float32)
    m, k = x.shape
    h = w1.shape[1]
    n = w2.shape[1]
    # fold BN: y = (x@W + b)*scale + shift == x@(W*scale) + (b*scale + shift)
    w1f = (w1 * scale1[None, :]).astype(jnp.bfloat16)
    s1f = (shift1 + b1 * scale1).reshape(1, h).astype(jnp.float32)
    w2f = (w2 * scale2[None, :]).astype(jnp.bfloat16)
    s2f = (shift2 + b2 * scale2).reshape(1, n).astype(jnp.float32)
    tm = m if m <= block_rows else block_rows
    grid = (pl.cdiv(m, tm),)
    return pl.pallas_call(
        functools.partial(_mlp2_kernel, relu_out=relu_out),
        out_shape=jax.ShapeDtypeStruct((m, n), jnp.float32),
        grid=grid,
        in_specs=[
            pl.BlockSpec((tm, k), lambda i: (i, 0)),
            pl.BlockSpec((k, h), lambda i: (0, 0)),
            pl.BlockSpec((1, h), lambda i: (0, 0)),
            pl.BlockSpec((h, n), lambda i: (0, 0)),
            pl.BlockSpec((1, n), lambda i: (0, 0)),
        ],
        out_specs=pl.BlockSpec((tm, n), lambda i: (i, 0)),
        compiler_params=pltpu.CompilerParams(
            dimension_semantics=("parallel",),
            vmem_limit_bytes=_VMEM_LIMIT,
        ),
    )(x, w1f, s1f, w2f, s2f)


# --------------------------------------------------------------------------
# Kernel 3: fused GIN layer (virtual-node add + message passing)
#   h_in = h + vn[batch]
#   out  = (1 + eps) * h_in + scatter_add_dst( relu(h_in[src] + edge_emb) )
# grid = edge tiles (reduction axis); out/h_in blocks are VMEM-resident;
# gather/scatter via bf16 one-hot MXU matmuls; eps read from SMEM.
# --------------------------------------------------------------------------
def _gin_layer_kernel(x_ref, vn_ref, batch_ref, ee_ref, src_ref, dst_ref,
                      eps_ref, hin_ref, out_ref, hbf_ref):
    n = x_ref.shape[0]
    te = src_ref.shape[0]

    @pl.when(pl.program_id(0) == 0)
    def _():
        g = vn_ref.shape[0]
        b_oh = (lax.broadcasted_iota(jnp.int32, (n, g), 1)
                == batch_ref[...]).astype(jnp.bfloat16)          # (N, G)
        hin = x_ref[...] + jnp.dot(b_oh, vn_ref[...].astype(jnp.bfloat16),
                                   preferred_element_type=jnp.float32)
        hin_ref[...] = hin
        hbf_ref[...] = hin.astype(jnp.bfloat16)
        out_ref[...] = (1.0 + eps_ref[0, 0]) * hin

    # gather h_in[src]: (TE, N) one-hot @ (N, D)
    src_oh = (lax.broadcasted_iota(jnp.int32, (te, n), 1)
              == src_ref[...]).astype(jnp.bfloat16)
    x_j = jnp.dot(src_oh, hbf_ref[...], preferred_element_type=jnp.float32)
    msg = jnp.maximum(x_j + ee_ref[...], 0.0)                    # (TE, D) f32
    # scatter-add into dst: (N, TE) one-hot @ (TE, D); padded edges have dst=-1
    dst_oh = (lax.broadcasted_iota(jnp.int32, (n, te), 0)
              == dst_ref[...]).astype(jnp.bfloat16)
    out_ref[...] += jnp.dot(dst_oh, msg.astype(jnp.bfloat16),
                            preferred_element_type=jnp.float32)


def gin_layer(x, vn, batch_col, edge_emb, src_col, dst_row, eps):
    x = x.astype(jnp.float32)
    n, d = x.shape
    g = vn.shape[0]
    e_pad = src_col.shape[0]
    te = _EDGE_TILE if e_pad > _EDGE_TILE else e_pad
    grid = (e_pad // te,)
    eps11 = jnp.asarray(eps, jnp.float32).reshape(1, 1)
    hin, out = pl.pallas_call(
        _gin_layer_kernel,
        out_shape=(jax.ShapeDtypeStruct((n, d), jnp.float32),
                   jax.ShapeDtypeStruct((n, d), jnp.float32)),
        grid=grid,
        in_specs=[
            pl.BlockSpec((n, d), lambda e: (0, 0)),          # h
            pl.BlockSpec((g, d), lambda e: (0, 0)),          # vn
            pl.BlockSpec((n, 1), lambda e: (0, 0)),          # batch (col)
            pl.BlockSpec((te, d), lambda e: (e, 0)),         # edge embedding
            pl.BlockSpec((te, 1), lambda e: (e, 0)),         # src (col)
            pl.BlockSpec((1, te), lambda e: (0, e)),         # dst (row)
            pl.BlockSpec(memory_space=pltpu.MemorySpace.SMEM),  # eps scalar
        ],
        out_specs=(pl.BlockSpec((n, d), lambda e: (0, 0)),
                   pl.BlockSpec((n, d), lambda e: (0, 0))),
        scratch_shapes=[pltpu.VMEM((n, d), jnp.bfloat16)],
        compiler_params=pltpu.CompilerParams(
            dimension_semantics=("arbitrary",),
            vmem_limit_bytes=_VMEM_LIMIT,
        ),
    )(x, vn.astype(jnp.float32), batch_col, edge_emb, src_col, dst_row, eps11)
    return hin, out


# --------------------------------------------------------------------------
# Kernel 4: segment pooling per graph:  out[g] = (sum|mean)_{batch==g} h + add[g]
# --------------------------------------------------------------------------
def _segment_pool_kernel(h_ref, batch_ref, add_ref, o_ref, *, mean):
    n = h_ref.shape[0]
    g = add_ref.shape[0]
    oh = (lax.broadcasted_iota(jnp.int32, (g, n), 0)
          == batch_ref[...]).astype(jnp.float32)                 # (G, N)
    pooled = jnp.dot(oh.astype(jnp.bfloat16),
                     h_ref[...].astype(jnp.bfloat16),
                     preferred_element_type=jnp.float32)
    if mean:
        counts = jnp.sum(oh, axis=1, keepdims=True)              # (G, 1) f32
        pooled = pooled / jnp.maximum(counts, 1.0)
    o_ref[...] = pooled + add_ref[...]


def segment_pool(h, batch_row, add, *, mean):
    # TODO(synk): tile over nodes with an accumulator grid for very large N.
    h = h.astype(jnp.float32)
    n, d = h.shape
    g = add.shape[0]
    return pl.pallas_call(
        functools.partial(_segment_pool_kernel, mean=mean),
        out_shape=jax.ShapeDtypeStruct((g, d), jnp.float32),
        in_specs=[
            pl.BlockSpec((n, d), lambda: (0, 0)),
            pl.BlockSpec((1, n), lambda: (0, 0)),
            pl.BlockSpec((g, d), lambda: (0, 0)),
        ],
        out_specs=pl.BlockSpec((g, d), lambda: (0, 0)),
        compiler_params=pltpu.CompilerParams(vmem_limit_bytes=_VMEM_LIMIT),
    )(h, batch_row, add.astype(jnp.float32))


# --------------------------------------------------------------------------
# Parameter init + BN fold
# --------------------------------------------------------------------------
def _bn_fold(gamma, beta, mean, var, eps=1e-5):
    scale = gamma / jnp.sqrt(var + eps)
    shift = beta - mean * scale
    return scale, shift


def init_params(key, num_layer, emb_dim, num_class, edge_dim=7):
    keys = iter(jax.random.split(key, 16 * num_layer + 16))

    def nrm(shape, s=0.1):
        return s * jax.random.normal(next(keys), shape, jnp.float32)

    def pos(shape):
        return jax.random.uniform(next(keys), shape, jnp.float32, 0.5, 1.5)

    params = {
        'node_enc_w': nrm((1, emb_dim)),
        'vn_w': jnp.zeros((1, emb_dim), jnp.float32),  # torch init constant 0
        'pred_w': nrm((emb_dim, num_class)),
        'pred_b': nrm((num_class,)),
        'layers': [],
        'vn_mlps': [],
    }
    for _ in range(num_layer):
        params['layers'].append(dict(
            we=nrm((edge_dim, emb_dim)), be=nrm((emb_dim,)),
            eps=jnp.zeros((), jnp.float32),
            w1=nrm((emb_dim, 2 * emb_dim)), b1=nrm((2 * emb_dim,)),
            bn1_gamma=pos((2 * emb_dim,)), bn1_beta=nrm((2 * emb_dim,)),
            bn1_mean=nrm((2 * emb_dim,)), bn1_var=pos((2 * emb_dim,)),
            w2=nrm((2 * emb_dim, emb_dim)), b2=nrm((emb_dim,)),
            obn_gamma=pos((emb_dim,)), obn_beta=nrm((emb_dim,)),
            obn_mean=nrm((emb_dim,)), obn_var=pos((emb_dim,)),
        ))
    for _ in range(num_layer - 1):
        params['vn_mlps'].append(dict(
            w1=nrm((emb_dim, 2 * emb_dim)), b1=nrm((2 * emb_dim,)),
            bn1_gamma=pos((2 * emb_dim,)), bn1_beta=nrm((2 * emb_dim,)),
            bn1_mean=nrm((2 * emb_dim,)), bn1_var=pos((2 * emb_dim,)),
            w2=nrm((2 * emb_dim, emb_dim)), b2=nrm((emb_dim,)),
            bn2_gamma=pos((emb_dim,)), bn2_beta=nrm((emb_dim,)),
            bn2_mean=nrm((emb_dim,)), bn2_var=pos((emb_dim,)),
        ))
    return params


# --------------------------------------------------------------------------
# Full GNN forward (Pallas), eval mode (dropout identity, BN running stats)
# --------------------------------------------------------------------------
def gnn_forward(params, edge_index, edge_attr, batch, num_nodes, num_graphs,
                *, num_layer, residual=False, JK='last', graph_pooling='mean'):
    if num_layer < 2:
        raise ValueError('Number of GNN layers must be greater than 1.')
    D = params['node_enc_w'].shape[1]
    N, G = num_nodes, num_graphs
    E = edge_attr.shape[0]

    # Pad edges to a multiple of the edge tile; padded edges use dst=-1 so they
    # never scatter, src=0 (harmless gather), edge_attr=0.
    e_pad = max(_EDGE_TILE, ((E + _EDGE_TILE - 1) // _EDGE_TILE) * _EDGE_TILE)
    pad = e_pad - E
    src = jnp.concatenate([edge_index[0].astype(jnp.int32),
                           jnp.zeros((pad,), jnp.int32)])
    dst = jnp.concatenate([edge_index[1].astype(jnp.int32),
                           jnp.full((pad,), -1, jnp.int32)])
    ea = jnp.concatenate([edge_attr.astype(jnp.float32),
                          jnp.zeros((pad, edge_attr.shape[1]), jnp.float32)])
    src_col = src.reshape(e_pad, 1)
    dst_row = dst.reshape(1, e_pad)
    batch_col = batch.astype(jnp.int32).reshape(N, 1)
    batch_row = batch.astype(jnp.int32).reshape(1, N)
    zeros_g = jnp.zeros((G, D), jnp.float32)

    # node_encoder = Embedding(1, D) on all-zero indices -> broadcast row 0
    h = jnp.broadcast_to(params['node_enc_w'], (N, D)).astype(jnp.float32)
    # virtualnode_embedding(zeros) -> broadcast row 0 per graph (init 0)
    vn = jnp.broadcast_to(params['vn_w'], (G, D)).astype(jnp.float32)

    h_list = []
    for layer in range(num_layer):
        lp = params['layers'][layer]
        is_last = layer == num_layer - 1

        # edge encoder (hoisted out of the per-edge-tile path)
        edge_emb = fused_linear(ea, lp['we'], lp['be'])           # (E_pad, D)

        # fused: h_in = h + vn[batch]; t = (1+eps)*h_in + scatter(relu(...))
        h_in, t = gin_layer(h, vn, batch_col, edge_emb, src_col, dst_row,
                            lp['eps'])
        h_list.append(h_in)

        # node MLP: Linear->BN->ReLU->Linear, then outer BN (+ReLU if not last)
        s1, sh1 = _bn_fold(lp['bn1_gamma'], lp['bn1_beta'],
                           lp['bn1_mean'], lp['bn1_var'])
        s2, sh2 = _bn_fold(lp['obn_gamma'], lp['obn_beta'],
                           lp['obn_mean'], lp['obn_var'])
        h_out = fused_mlp2(t, lp['w1'], lp['b1'], s1, sh1,
                           lp['w2'], lp['b2'], s2, sh2,
                           relu_out=not is_last)
        # dropout: eval-mode identity
        if residual:
            h_out = h_out + h_in

        # virtual-node update (not on last layer)
        if not is_last:
            vp = params['vn_mlps'][layer]
            vn_tmp = segment_pool(h_in, batch_row, vn, mean=False)
            vs1, vsh1 = _bn_fold(vp['bn1_gamma'], vp['bn1_beta'],
                                 vp['bn1_mean'], vp['bn1_var'])
            vs2, vsh2 = _bn_fold(vp['bn2_gamma'], vp['bn2_beta'],
                                 vp['bn2_mean'], vp['bn2_var'])
            vn_new = fused_mlp2(vn_tmp, vp['w1'], vp['b1'], vs1, vsh1,
                                vp['w2'], vp['b2'], vs2, vsh2, relu_out=True)
            vn = vn + vn_new if residual else vn_new
        h = h_out
    h_list.append(h)

    if JK == 'last':
        node_repr = h_list[-1]
    else:  # 'sum'
        node_repr = h_list[0]
        for hh in h_list[1:]:
            node_repr = node_repr + hh

    if graph_pooling == 'mean':
        h_graph = segment_pool(node_repr, batch_row, zeros_g, mean=True)
    elif graph_pooling == 'sum':
        h_graph = segment_pool(node_repr, batch_row, zeros_g, mean=False)
    else:
        raise ValueError('Unsupported graph pooling type: %s' % graph_pooling)

    return fused_linear(h_graph, params['pred_w'], params['pred_b'])


# --------------------------------------------------------------------------
# Pure-JAX reference (same eval-mode semantics) for validation
# --------------------------------------------------------------------------
def gnn_forward_ref(params, edge_index, edge_attr, batch, num_nodes, num_graphs,
                    *, num_layer, residual=False, JK='last', graph_pooling='mean'):
    HI = jax.lax.Precision.HIGHEST
    D = params['node_enc_w'].shape[1]
    N, G = num_nodes, num_graphs
    src, dst = edge_index[0], edge_index[1]

    def bn(x, g_, b_, m_, v_, eps=1e-5):
        return (x - m_) / jnp.sqrt(v_ + eps) * g_ + b_

    h = jnp.broadcast_to(params['node_enc_w'], (N, D)).astype(jnp.float32)
    vn = jnp.broadcast_to(params['vn_w'], (G, D)).astype(jnp.float32)
    h_list = []
    for layer in range(num_layer):
        lp = params['layers'][layer]
        is_last = layer == num_layer - 1
        h_in = h + vn[batch]
        h_list.append(h_in)
        e_emb = jnp.dot(edge_attr, lp['we'], precision=HI) + lp['be']
        msg = jax.nn.relu(h_in[src] + e_emb)
        aggr = jax.ops.segment_sum(msg, dst, num_segments=N)
        t = (1.0 + lp['eps']) * h_in + aggr
        u = jax.nn.relu(bn(jnp.dot(t, lp['w1'], precision=HI) + lp['b1'],
                           lp['bn1_gamma'], lp['bn1_beta'],
                           lp['bn1_mean'], lp['bn1_var']))
        h_out = bn(jnp.dot(u, lp['w2'], precision=HI) + lp['b2'],
                   lp['obn_gamma'], lp['obn_beta'],
                   lp['obn_mean'], lp['obn_var'])
        if not is_last:
            h_out = jax.nn.relu(h_out)
        if residual:
            h_out = h_out + h_in
        if not is_last:
            vp = params['vn_mlps'][layer]
            vn_tmp = jax.ops.segment_sum(h_in, batch, num_segments=G) + vn
            v1 = jax.nn.relu(bn(jnp.dot(vn_tmp, vp['w1'], precision=HI) + vp['b1'],
                                vp['bn1_gamma'], vp['bn1_beta'],
                                vp['bn1_mean'], vp['bn1_var']))
            vn_new = jax.nn.relu(bn(jnp.dot(v1, vp['w2'], precision=HI) + vp['b2'],
                                    vp['bn2_gamma'], vp['bn2_beta'],
                                    vp['bn2_mean'], vp['bn2_var']))
            vn = vn + vn_new if residual else vn_new
        h = h_out
    h_list.append(h)
    node_repr = h_list[-1] if JK == 'last' else sum(h_list)
    seg = jax.ops.segment_sum(node_repr, batch, num_segments=G)
    if graph_pooling == 'mean':
        counts = jax.ops.segment_sum(jnp.ones((N,), jnp.float32), batch,
                                     num_segments=G)
        h_graph = seg / jnp.maximum(counts, 1.0)[:, None]
    else:
        h_graph = seg
    return jnp.dot(h_graph, params['pred_w'], precision=HI) + params['pred_b']


if __name__ == "__main__":
    key = jax.random.PRNGKey(0)
    k_param, k_e0, k_e1, k_attr = jax.random.split(key, 4)

    num_layer = 2          # module requires >= 2
    emb_dim = 128          # lane-dense feature width (multiple of 128)
    num_class = 4
    nodes_per_graph = 12
    num_graphs = 2
    N = nodes_per_graph * num_graphs
    e_per_graph = 24
    E = e_per_graph * num_graphs

    params = init_params(k_param, num_layer, emb_dim, num_class)

    # two graphs; edges stay within each graph
    ei0 = jax.random.randint(k_e0, (2, e_per_graph), 0, nodes_per_graph)
    ei1 = jax.random.randint(k_e1, (2, e_per_graph), 0, nodes_per_graph) + nodes_per_graph
    edge_index = jnp.concatenate([ei0, ei1], axis=1).astype(jnp.int32)   # (2, E)
    edge_attr = jax.random.normal(k_attr, (E, 7), jnp.float32)
    batch = jnp.concatenate([jnp.zeros((nodes_per_graph,), jnp.int32),
                             jnp.ones((nodes_per_graph,), jnp.int32)])

    out = gnn_forward(params, edge_index, edge_attr, batch, N, num_graphs,
                      num_layer=num_layer, graph_pooling='mean')
    out = jax.block_until_ready(out)

    ref = gnn_forward_ref(params, edge_index, edge_attr, batch, N, num_graphs,
                          num_layer=num_layer, graph_pooling='mean')

    assert out.shape == (num_graphs, num_class)
    # bf16 MXU operands with f32 accumulation vs. f32 HIGHEST reference
    assert jnp.allclose(out, ref, rtol=3e-2, atol=3e-2), (out, ref)
    print("KERNEL_OK")
</pallas_src>

<mosaic_0001>
module attributes {stable_mosaic.version = 11 : i64} {
  func.func @_linear_kernel(%arg0: i32, %arg1: memref<256x7xf32, #tpu.memory_space<vmem>>, %arg2: memref<7x128xbf16, #tpu.memory_space<vmem>>, %arg3: memref<1x128xf32, #tpu.memory_space<vmem>>, %arg4: memref<256x128xf32, #tpu.memory_space<vmem>>) attributes {dimension_semantics = [#tpu.dimension_semantics<parallel>], iteration_bounds = array<i64: 1>, scalar_prefetch = 0 : i64, scratch_operands = 0 : i64, tpu.core_type = #tpu.core_type<tc>, window_params = [{transform_indices = @transform_0, window_bounds = array<i64: 256, 7>}, {pipeline_mode = #tpu.pipeline_mode<synchronous>, transform_indices = @transform_1, window_bounds = array<i64: 7, 128>}, {pipeline_mode = #tpu.pipeline_mode<synchronous>, transform_indices = @transform_2, window_bounds = array<i64: 1, 128>}, {transform_indices = @transform_3, window_bounds = array<i64: 256, 128>}]} {
    %c0 = arith.constant 0 : index
    %c0_0 = arith.constant 0 : index
    %0 = vector.load %arg1[%c0, %c0_0] : memref<256x7xf32, #tpu.memory_space<vmem>>, vector<256x7xf32>
    %1 = arith.truncf %0 : vector<256x7xf32> to vector<256x7xbf16>
    %c0_1 = arith.constant 0 : index
    %c0_2 = arith.constant 0 : index
    %2 = vector.load %arg2[%c0_1, %c0_2] : memref<7x128xbf16, #tpu.memory_space<vmem>>, vector<7x128xbf16>
    %cst = arith.constant dense<0.000000e+00> : vector<256x128xf32>
    %3 = tpu.matmul %1, %2, %cst {dimension_numbers = #tpu.dot_dimension_numbers<[1], [0], [0], [1], [0, 0, 1, 1], [], []>} : vector<256x7xbf16>, vector<7x128xbf16>, vector<256x128xf32> -> vector<256x128xf32>
    %c0_3 = arith.constant 0 : index
    %c0_4 = arith.constant 0 : index
    %4 = vector.load %arg3[%c0_3, %c0_4] : memref<1x128xf32, #tpu.memory_space<vmem>>, vector<1x128xf32>
    %5 = vector.broadcast %4 : vector<1x128xf32> to vector<256x128xf32>
    %6 = arith.addf %3, %5 : vector<256x128xf32>
    %c0_5 = arith.constant 0 : index
    %c0_6 = arith.constant 0 : index
    %7 = vector.load %arg4[%c0_5, %c0_6] : memref<256x128xf32, #tpu.memory_space<vmem>>, vector<256x128xf32>
    tpu.vector_store %arg4[%c0_5, %c0_6], %6 {strides = array<i32>} : memref<256x128xf32, #tpu.memory_space<vmem>>, vector<256x128xf32>,
    return
  }
  func.func @transform_0(%arg0: i32) -> (i32, i32) {
    %c0_i32 = arith.constant 0 : i32
    %c0_i32_0 = arith.constant 0 : i32
    return %arg0, %c0_i32 : i32, i32
  }
  func.func @transform_1(%arg0: i32) -> (i32, i32) {
    %c0_i32 = arith.constant 0 : i32
    %c0_i32_0 = arith.constant 0 : i32
    %c0_i32_1 = arith.constant 0 : i32
    return %c0_i32, %c0_i32_0 : i32, i32
  }
  func.func @transform_2(%arg0: i32) -> (i32, i32) {
    %c0_i32 = arith.constant 0 : i32
    %c0_i32_0 = arith.constant 0 : i32
    %c0_i32_1 = arith.constant 0 : i32
    return %c0_i32, %c0_i32_0 : i32, i32
  }
  func.func @transform_3(%arg0: i32) -> (i32, i32) {
    %c0_i32 = arith.constant 0 : i32
    %c0_i32_0 = arith.constant 0 : i32
    return %arg0, %c0_i32 : i32, i32
  }
}

</mosaic_0001>

<llo_original>
// kernel: tpu_custom_call.1
$region0: #{tpu_custom_call.1}
  #allocation0 [shape = 'u32[]', space=smem, size = 0x4, offset = 0x4, fixed_abs, tag = 'smem constant byte address 0x4 - core index']
  #allocation1 [shape = 'u32[72,128]{1,0:T(1,128)}', space=vmem, size = 0x9000, scoped, tag = 'internal scratch']
  %s0 = inlined_call_operand.vmem [shape: f32[256,7], index: 0, kind: input, shape index: {}]
  %s1 = inlined_call_operand.vmem [shape: bf16[7,128], index: 1, kind: input, shape index: {}]
  %s2 = inlined_call_operand.vmem [shape: f32[1,128], index: 2, kind: input, shape index: {}]
  %s3 = inlined_call_operand.hbm [shape: f32[256,128], index: 3, kind: output, shape index: {}]
  %s4 = sld [smem:[#allocation0]]
  $region22: #{tpu_custom_call.1} parent=0
    _
  %s6 = ssub.s32 1, %s4
  %s7 = scalar_select 0, %s6, %s4
  $region1: #{tpu_custom_call.1} parent=0
    #allocation2 [shape = 'u8[131072]{0}', space=vmem, size = 0x20000, scoped, tag = 'output window, operand 0, single buffered']
    #allocation3 [shape = 's32[1]{0}', space=sflag, size = 0x4, scoped, tag = 'scoped memory for tpu_custom_call.1']
    %8 = vsyncpa [#allocation3], 0
    // Predicated region
    $region2: #{tpu_custom_call.1} parent=1 // pred_check
      _
    $region3: #{tpu_custom_call.1} parent=1 // pred_check_branch
      %10 = sbr.rel (0) target = $region5
    $region4: #{tpu_custom_call.1} parent=1 // pred_region
      _
    $region5: #{tpu_custom_call.1} parent=1 // pred_fallthru
      _
    // Predicated region
    $region6: #{tpu_custom_call.1} parent=1 // pred_check
      _
    $region7: #{tpu_custom_call.1} parent=1 // pred_check_branch
      %12 = sbr.rel (0) target = $region9
    $region8: #{tpu_custom_call.1} parent=1 // pred_region
      _
    $region9: #{tpu_custom_call.1} parent=1 // pred_fallthru
      _
    // Predicated region
    $region10: #{tpu_custom_call.1} parent=1 // pred_check
      _
    $region11: #{tpu_custom_call.1} parent=1 // pred_check_branch
      %14 = sbr.rel (0) target = $region13
    $region12: #{tpu_custom_call.1} parent=1 // pred_region
      _
    $region13: #{tpu_custom_call.1} parent=1 // pred_fallthru
      _
    %v16 = vld [vmem:[%s0] sm:$0xff]
    %v17 = vld [vmem:[%s0 + $0x8] sm:$0xff]
    %v18 = vld [vmem:[%s0 + $0x10] sm:$0xff]
    %v19 = vld [vmem:[%s0 + $0x18] sm:$0xff]
    %v20 = vld [vmem:[%s0 + $0x20] sm:$0xff]
    %v21 = vld [vmem:[%s0 + $0x28] sm:$0xff]
    %v22 = vld [vmem:[%s0 + $0x30] sm:$0xff]
    %v23 = vld [vmem:[%s0 + $0x38] sm:$0xff]
    %v24 = vld [vmem:[%s0 + $0x40] sm:$0xff]
    %v25 = vld [vmem:[%s0 + $0x48] sm:$0xff]
    %v26 = vld [vmem:[%s0 + $0x50] sm:$0xff]
    %v27 = vld [vmem:[%s0 + $0x58] sm:$0xff]
    %v28 = vld [vmem:[%s0 + $0x60] sm:$0xff]
    %v29 = vld [vmem:[%s0 + $0x68] sm:$0xff]
    %v30 = vld [vmem:[%s0 + $0x70] sm:$0xff]
    %v31 = vld [vmem:[%s0 + $0x78] sm:$0xff]
    %v32 = vld [vmem:[%s0 + $0x80] sm:$0xff]
    %v33 = vld [vmem:[%s0 + $0x88] sm:$0xff]
    %v34 = vld [vmem:[%s0 + $0x90] sm:$0xff]
    %v35 = vld [vmem:[%s0 + $0x98] sm:$0xff]
    %v36 = vld [vmem:[%s0 + $0xa0] sm:$0xff]
    %v37 = vld [vmem:[%s0 + $0xa8] sm:$0xff]
    %v38 = vld [vmem:[%s0 + $0xb0] sm:$0xff]
    %v39 = vld [vmem:[%s0 + $0xb8] sm:$0xff]
    %v40 = vld [vmem:[%s0 + $0xc0] sm:$0xff]
    %v41 = vld [vmem:[%s0 + $0xc8] sm:$0xff]
    %v42 = vld [vmem:[%s0 + $0xd0] sm:$0xff]
    %v43 = vld [vmem:[%s0 + $0xd8] sm:$0xff]
    %v44 = vld [vmem:[%s0 + $0xe0] sm:$0xff]
    %v45 = vld [vmem:[%s0 + $0xe8] sm:$0xff]
    %v46 = vld [vmem:[%s0 + $0xf0] sm:$0xff]
    %v47 = vld [vmem:[%s0 + $0xf8] sm:$0xff]
    %v48 = vpack.c.bf16 %v17, %v16
    %v49 = vpack.c.bf16 %v19, %v18
    %v50 = vpack.c.bf16 %v21, %v20
    %v51 = vpack.c.bf16 %v23, %v22
    %v52 = vpack.c.bf16 %v25, %v24
    %v53 = vpack.c.bf16 %v27, %v26
    %v54 = vpack.c.bf16 %v29, %v28
    %v55 = vpack.c.bf16 %v31, %v30
    %v56 = vpack.c.bf16 %v33, %v32
    %v57 = vpack.c.bf16 %v35, %v34
    %v58 = vpack.c.bf16 %v37, %v36
    %v59 = vpack.c.bf16 %v39, %v38
    %v60 = vpack.c.bf16 %v41, %v40
    %v61 = vpack.c.bf16 %v43, %v42
    %v62 = vpack.c.bf16 %v45, %v44
    %v63 = vpack.c.bf16 %v47, %v46
    %v64 = vld [vmem:[%s1] sm:$0xf]
    %v65 = vld [vmem:[%s2] sm:$0x1]
    %v67 = vperm.slane %v65, 0
    %vm69 = vcmask 56320
    %v71 = vsel %vm69, %v48, 0
    %v74 = vsel %vm69, %v49, 0
    %v77 = vsel %vm69, %v50, 0
    %v80 = vsel %vm69, %v51, 0
    %v83 = vsel %vm69, %v52, 0
    %v86 = vsel %vm69, %v53, 0
    %v89 = vsel %vm69, %v54, 0
    %v92 = vsel %vm69, %v55, 0
    %v95 = vsel %vm69, %v56, 0
    %v98 = vsel %vm69, %v57, 0
    %v101 = vsel %vm69, %v58, 0
    %v104 = vsel %vm69, %v59, 0
    %v107 = vsel %vm69, %v60, 0
    %v110 = vsel %vm69, %v61, 0
    %v113 = vsel %vm69, %v62, 0
    %v116 = vsel %vm69, %v63, 0
    %vm118 = vcmask 1042432
    %vm119 = vcmask 1043456
    %v120 = vsel %vm118, 4294967295, 65535
    %v121 = vsel %vm119, %v120, 0
    %v123 = vand.u32 %v64, %v121
    %125 = vmatpush.bf16.msra.mxu0 0
    %126 = vmatpush.bf16.msra.mxu0 0
    %127 = vmatpush.bf16.msra.mxu0 0
    %128 = vmatpush.bf16.msra.mxu0 0
    %129 = vmatpush.bf16.msra.mxu0 0
    %130 = vmatpush.bf16.msra.mxu0 0
    %131 = vmatpush.bf16.msra.mxu0 0
    %132 = vmatpush.bf16.msra.mxu0 %v123
    %133 = vmatmul.bf16.gmra.mxu0 %v71
    %v134 = vpop.f32.mrf.mxu0
    %v135 = vadd.f32 %v67, %v134
    %v136 = vpop.f32.mrf.mxu0
    %v137 = vadd.f32 %v67, %v136
    %138 = vmatmul.bf16.gmra.mxu0 %v74
    %v139 = vpop.f32.mrf.mxu0
    %v140 = vadd.f32 %v67, %v139
    %v141 = vpop.f32.mrf.mxu0
    %v142 = vadd.f32 %v67, %v141
    %143 = vmatmul.bf16.gmra.mxu0 %v77
    %v144 = vpop.f32.mrf.mxu0
    %v145 = vadd.f32 %v67, %v144
    %v146 = vpop.f32.mrf.mxu0
    %v147 = vadd.f32 %v67, %v146
    %148 = vmatmul.bf16.gmra.mxu0 %v80
    %v149 = vpop.f32.mrf.mxu0
    %v150 = vadd.f32 %v67, %v149
    %v151 = vpop.f32.mrf.mxu0
    %v152 = vadd.f32 %v67, %v151
    %153 = vmatmul.bf16.gmra.mxu0 %v83
    %v154 = vpop.f32.mrf.mxu0
    %v155 = vadd.f32 %v67, %v154
    %v156 = vpop.f32.mrf.mxu0
    %v157 = vadd.f32 %v67, %v156
    %158 = vmatmul.bf16.gmra.mxu0 %v86
    %v159 = vpop.f32.mrf.mxu0
    %v160 = vadd.f32 %v67, %v159
    %v161 = vpop.f32.mrf.mxu0
    %v162 = vadd.f32 %v67, %v161
    %163 = vmatmul.bf16.gmra.mxu0 %v89
    %v164 = vpop.f32.mrf.mxu0
    %v165 = vadd.f32 %v67, %v164
    %v166 = vpop.f32.mrf.mxu0
    %v167 = vadd.f32 %v67, %v166
    %168 = vmatmul.bf16.gmra.mxu0 %v92
    %v169 = vpop.f32.mrf.mxu0
    %v170 = vadd.f32 %v67, %v169
    %v171 = vpop.f32.mrf.mxu0
    %v172 = vadd.f32 %v67, %v171
    %173 = vmatmul.bf16.gmra.mxu0 %v95
    %v174 = vpop.f32.mrf.mxu0
    %v175 = vadd.f32 %v67, %v174
    %v176 = vpop.f32.mrf.mxu0
    %v177 = vadd.f32 %v67, %v176
    %178 = vmatmul.bf16.gmra.mxu0 %v98
    %v179 = vpop.f32.mrf.mxu0
    %v180 = vadd.f32 %v67, %v179
    %v181 = vpop.f32.mrf.mxu0
    %v182 = vadd.f32 %v67, %v181
    %183 = vmatmul.bf16.gmra.mxu0 %v101
    %v184 = vpop.f32.mrf.mxu0
    %v185 = vadd.f32 %v67, %v184
    %v186 = vpop.f32.mrf.mxu0
    %v187 = vadd.f32 %v67, %v186
    %188 = vmatmul.bf16.gmra.mxu0 %v104
    %v189 = vpop.f32.mrf.mxu0
    %v190 = vadd.f32 %v67, %v189
    %v191 = vpop.f32.mrf.mxu0
    %v192 = vadd.f32 %v67, %v191
    %193 = vmatmul.bf16.gmra.mxu0 %v107
    %v194 = vpop.f32.mrf.mxu0
    %v195 = vadd.f32 %v67, %v194
    %v196 = vpop.f32.mrf.mxu0
    %v197 = vadd.f32 %v67, %v196
    %198 = vmatmul.bf16.gmra.mxu0 %v110
    %v199 = vpop.f32.mrf.mxu0
    %v200 = vadd.f32 %v67, %v199
    %v201 = vpop.f32.mrf.mxu0
    %v202 = vadd.f32 %v67, %v201
    %203 = vmatmul.bf16.gmra.mxu0 %v113
    %v204 = vpop.f32.mrf.mxu0
    %v205 = vadd.f32 %v67, %v204
    %v206 = vpop.f32.mrf.mxu0
    %v207 = vadd.f32 %v67, %v206
    %208 = vmatmul.bf16.gmra.mxu0 %v116
    %v209 = vpop.f32.mrf.mxu0
    %v210 = vadd.f32 %v67, %v209
    %v211 = vpop.f32.mrf.mxu0
    %v212 = vadd.f32 %v67, %v211
    %213 = vdwg.mxu0
    %214 = vst [vmem:[#allocation2] sm:$0xff] %v135
    %215 = vst [vmem:[#allocation2 + $0x8] sm:$0xff] %v137
    %216 = vst [vmem:[#allocation2 + $0x10] sm:$0xff] %v140
    %217 = vst [vmem:[#allocation2 + $0x18] sm:$0xff] %v142
    %218 = vst [vmem:[#allocation2 + $0x20] sm:$0xff] %v145
    %219 = vst [vmem:[#allocation2 + $0x28] sm:$0xff] %v147
    %220 = vst [vmem:[#allocation2 + $0x30] sm:$0xff] %v150
    %221 = vst [vmem:[#allocation2 + $0x38] sm:$0xff] %v152
    %222 = vst [vmem:[#allocation2 + $0x40] sm:$0xff] %v155
    %223 = vst [vmem:[#allocation2 + $0x48] sm:$0xff] %v157
    %224 = vst [vmem:[#allocation2 + $0x50] sm:$0xff] %v160
    %225 = vst [vmem:[#allocation2 + $0x58] sm:$0xff] %v162
    %226 = vst [vmem:[#allocation2 + $0x60] sm:$0xff] %v165
    %227 = vst [vmem:[#allocation2 + $0x68] sm:$0xff] %v167
    %228 = vst [vmem:[#allocation2 + $0x70] sm:$0xff] %v170
    %229 = vst [vmem:[#allocation2 + $0x78] sm:$0xff] %v172
    %230 = vst [vmem:[#allocation2 + $0x80] sm:$0xff] %v175
    %231 = vst [vmem:[#allocation2 + $0x88] sm:$0xff] %v177
    %232 = vst [vmem:[#allocation2 + $0x90] sm:$0xff] %v180
    %233 = vst [vmem:[#allocation2 + $0x98] sm:$0xff] %v182
    %234 = vst [vmem:[#allocation2 + $0xa0] sm:$0xff] %v185
    %235 = vst [vmem:[#allocation2 + $0xa8] sm:$0xff] %v187
    %236 = vst [vmem:[#allocation2 + $0xb0] sm:$0xff] %v190
    %237 = vst [vmem:[#allocation2 + $0xb8] sm:$0xff] %v192
    %238 = vst [vmem:[#allocation2 + $0xc0] sm:$0xff] %v195
    %239 = vst [vmem:[#allocation2 + $0xc8] sm:$0xff] %v197
    %240 = vst [vmem:[#allocation2 + $0xd0] sm:$0xff] %v200
    %241 = vst [vmem:[#allocation2 + $0xd8] sm:$0xff] %v202
    %242 = vst [vmem:[#allocation2 + $0xe0] sm:$0xff] %v205
    %243 = vst [vmem:[#allocation2 + $0xe8] sm:$0xff] %v207
    %244 = vst [vmem:[#allocation2 + $0xf0] sm:$0xff] %v210
    %245 = vst [vmem:[#allocation2 + $0xf8] sm:$0xff] %v212
    // Predicated region
    $region14: #{tpu_custom_call.1} parent=1 // pred_check
      _
    $region15: #{tpu_custom_call.1} parent=1 // pred_check_branch
      %247 = sbr.rel (0) target = $region17
    $region16: #{tpu_custom_call.1} parent=1 // pred_region
      %249 = vsyncadd [#allocation3], 0
      %s250 = sshll.u32 [#allocation2], 4
      %s251 = int_to_ptr.vmem [resolvable:$true] %s250
      %s252 = sshll.u32 %s3, 4
      %s253 = int_to_ptr.hbm [resolvable:$true] %s252
      %258 = dma.vmem_to_hbm [thread:$0]  %s251, 4096, %s253, [#allocation3], 128, 128, 8
    $region17: #{tpu_custom_call.1} parent=1 // pred_fallthru
      _
    // Predicated region
    $region18: #{tpu_custom_call.1} parent=1 // pred_check
      _
    $region19: #{tpu_custom_call.1} parent=1 // pred_check_branch
      %260 = sbr.rel (0) target = $region21
    $region20: #{tpu_custom_call.1} parent=1 // pred_region
      %262 = dma.done [#allocation3], 4096
    $region21: #{tpu_custom_call.1} parent=1 // pred_fallthru
      _
    %263 = vsyncpa [#allocation3], 1

</llo_original>
